<compile_context>
chip_gen: v7x
topology: tpu7x:2x2x1
jax: 0.10.0
libtpu: 0.0.40
codegen_flags: <defaults>
</compile_context>

<pallas_src>
import functools

import jax
import jax.numpy as jnp
from jax.experimental import pallas as pl
from jax.experimental.pallas import tpu as pltpu


def clip_wrapper_kernel(labels_ref, patches_ref, w_patch_ref, b_patch_ref,
                        w_head_ref, b_cls_ref, per_img_ref, loss_ref, acc_ref,
                        *, n_img):
    b = pl.program_id(0)
    nb = pl.num_programs(0)

    @pl.when(b == 0)
    def _init():
        acc_ref[...] = jnp.zeros_like(acc_ref)

    # ---- "encode_image" for image b ----
    # patch embedding on the MXU: (P, K)bf16 @ (K, D)bf16 -> (P, D)f32
    emb = jnp.dot(patches_ref[0], w_patch_ref[...],
                  preferred_element_type=jnp.float32) + b_patch_ref[...]
    emb = jax.nn.gelu(emb)                                       # f32 VPU/EUP
    # mean-pool over patches: sublane reduction, no pooling matmul
    pooled = jnp.sum(emb, axis=0, keepdims=True) * (1.0 / emb.shape[0])  # (1, D)

    # ---- folded projection + classifier head for this image ----
    # (1, D)bf16 @ (D, C_pad)bf16 -> (1, C_pad)f32 on the MXU
    logits = jnp.dot(pooled.astype(w_head_ref.dtype), w_head_ref[...],
                     preferred_element_type=jnp.float32) + b_cls_ref[...]

    # ---- CrossEntropy (reduction='none'), max-stabilized LSE ----
    # Padded class columns carry a -1e30 bias -> exp underflows to 0.
    m = jnp.max(logits, axis=-1, keepdims=True)
    lse = jnp.log(jnp.sum(jnp.exp(logits - m), axis=-1, keepdims=True)) + m
    cls_ids = jax.lax.broadcasted_iota(jnp.int32, logits.shape, 1)
    tgt = jnp.sum(jnp.where(cls_ids == labels_ref[b], logits, 0.0),
                  axis=-1, keepdims=True)                        # (1, 1)
    ce = lse - tgt                                               # (1, 1)

    per_img_ref[0, b] = jnp.sum(ce)      # per-image loss -> SMEM (dynamic index)
    acc_ref[...] += ce                   # running sum of per-image losses

    @pl.when(b == nb - 1)
    def _finalize():
        loss_ref[0, 0] = jnp.sum(acc_ref[...]) * (1.0 / n_img)


def clip_wrapper_forward(image_nchw, labels, params, *, patch=8):
    """JAX glue: patch extraction, offline head fold/padding, one fused pallas_call."""
    B, C, H, W = image_nchw.shape
    P_h, P_w = H // patch, W // patch
    P = P_h * P_w
    K = C * patch * patch
    D = params["w_patch"].shape[1]
    num_classes = params["w_cls"].shape[1]
    C_pad = ((num_classes + 127) // 128) * 128     # lane-align the class dim

    # NCHW -> non-overlapping p x p patches -> (B, P, K); bf16 MXU operands
    x = image_nchw.reshape(B, C, P_h, patch, P_w, patch)
    x = jnp.transpose(x, (0, 2, 4, 1, 3, 5))
    patches = x.reshape(B, P, K).astype(jnp.bfloat16)

    # Fold projection + classifier head offline (f32), pad classes, cast bf16.
    w_head = params["w_proj"].astype(jnp.float32) @ params["w_cls"].astype(jnp.float32)
    w_head = jnp.pad(w_head, ((0, 0), (0, C_pad - num_classes))).astype(jnp.bfloat16)
    b_cls = jnp.pad(params["b_cls"].astype(jnp.float32),
                    ((0, 0), (0, C_pad - num_classes)), constant_values=-1e30)

    w_patch = params["w_patch"].astype(jnp.bfloat16)
    b_patch = params["b_patch"].astype(jnp.float32)
    labels_i32 = labels.astype(jnp.int32)

    grid_spec = pltpu.PrefetchScalarGridSpec(
        num_scalar_prefetch=1,                                  # labels -> SMEM
        grid=(B,),
        in_specs=[
            pl.BlockSpec((1, P, K), lambda b, lbl: (b, 0, 0)),  # patches of image b
            pl.BlockSpec((K, D), lambda b, lbl: (0, 0)),        # w_patch (VMEM-resident)
            pl.BlockSpec((1, D), lambda b, lbl: (0, 0)),        # b_patch
            pl.BlockSpec((D, C_pad), lambda b, lbl: (0, 0)),    # folded head weight
            pl.BlockSpec((1, C_pad), lambda b, lbl: (0, 0)),    # padded head bias
        ],
        out_specs=(
            pl.BlockSpec((1, B), lambda b, lbl: (0, 0),
                         memory_space=pltpu.MemorySpace.SMEM),  # per-image CE losses
            pl.BlockSpec((1, 1), lambda b, lbl: (0, 0),
                         memory_space=pltpu.MemorySpace.SMEM),  # scalar mean loss
        ),
        scratch_shapes=[pltpu.VMEM((1, 1), jnp.float32)],       # loss-sum accumulator
    )

    cost = pl.CostEstimate(
        flops=2 * B * P * K * D + 2 * B * D * C_pad,
        transcendentals=B * P * D + B * C_pad,
        bytes_accessed=(B * P * K * 2 + B * 4 + K * D * 2 + D * 4
                        + D * C_pad * 2 + C_pad * 4 + B * 4 + 4),
    )

    per_image, loss = pl.pallas_call(
        functools.partial(clip_wrapper_kernel, n_img=B),
        grid_spec=grid_spec,
        out_shape=(jax.ShapeDtypeStruct((1, B), jnp.float32),
                   jax.ShapeDtypeStruct((1, 1), jnp.float32)),
        compiler_params=pltpu.CompilerParams(
            # scalar loss is reduced across the batch axis -> sequential grid
            dimension_semantics=("arbitrary",)),
        cost_estimate=cost,
    )(labels_i32, patches, w_patch, b_patch, w_head, b_cls)

    return loss[0, 0], per_image[0, :]


def make_params(key, *, K, D, E, num_classes):
    k1, k2, k3, k4 = jax.random.split(key, 4)
    return {
        "w_patch": (jax.random.normal(k1, (K, D), jnp.float32) * 0.02),
        "b_patch": jnp.zeros((1, D), jnp.float32),
        "w_proj":  (jax.random.normal(k2, (D, E), jnp.float32) * 0.02),
        "w_cls":   (jax.random.normal(k3, (E, num_classes), jnp.float32) * 0.02),
        "b_cls":   (jax.random.normal(k4, (1, num_classes), jnp.float32) * 0.02),
    }


def _reference_forward(image_nchw, labels, params, *, patch=8):
    """Pure-JAX f32 reference (unfolded head) for correctness checking."""
    B, C, H, W = image_nchw.shape
    P_h, P_w = H // patch, W // patch
    P = P_h * P_w
    K = C * patch * patch
    x = image_nchw.reshape(B, C, P_h, patch, P_w, patch)
    x = jnp.transpose(x, (0, 2, 4, 1, 3, 5)).reshape(B, P, K).astype(jnp.float32)
    emb = jax.nn.gelu(x @ params["w_patch"] + params["b_patch"])
    pooled = emb.mean(axis=1)
    feat = pooled @ params["w_proj"]
    logits = feat @ params["w_cls"] + params["b_cls"]
    logp = jax.nn.log_softmax(logits, axis=-1)
    per = -jnp.take_along_axis(logp, labels[:, None], axis=-1)[:, 0]
    return per.mean(), per


if __name__ == "__main__":
    # small shapes consistent with the module's forward
    B, C, H, W = 2, 3, 16, 16
    patch = 8
    K = C * patch * patch          # 192
    D = 128                        # patch-embed width
    E = 64                         # CLIP embedding dim (synthetic)
    num_classes = 16

    key = jax.random.PRNGKey(0)
    k_img, k_lbl, k_par = jax.random.split(key, 3)
    image = jax.random.normal(k_img, (B, C, H, W), jnp.float32)
    labels = jax.random.randint(k_lbl, (B,), 0, num_classes)
    params = make_params(k_par, K=K, D=D, E=E, num_classes=num_classes)

    loss, per_image = clip_wrapper_forward(image, labels, params, patch=patch)
    jax.block_until_ready((loss, per_image))

    ref_loss, ref_per = _reference_forward(image, labels, params, patch=patch)
    # bf16 MXU operands (f32 accumulation) vs. pure-f32 reference -> loosened tol
    assert jnp.allclose(loss, ref_loss, atol=5e-3, rtol=5e-3), (loss, ref_loss)
    assert jnp.allclose(per_image, ref_per, atol=5e-3, rtol=5e-3), (per_image, ref_per)

    print("KERNEL_OK")
</pallas_src>

<mosaic_0001>
module attributes {stable_mosaic.version = 11 : i64} {
  func.func @clip_wrapper_kernel(%arg0: i32, %arg1: memref<2xi32, #tpu.memory_space<smem>>, %arg2: memref<1x4x192xbf16, #tpu.memory_space<vmem>>, %arg3: memref<192x128xbf16, #tpu.memory_space<vmem>>, %arg4: memref<1x128xf32, #tpu.memory_space<vmem>>, %arg5: memref<128x128xbf16, #tpu.memory_space<vmem>>, %arg6: memref<1x128xf32, #tpu.memory_space<vmem>>, %arg7: memref<1x2xf32, #tpu.memory_space<smem>>, %arg8: memref<1x1xf32, #tpu.memory_space<smem>>, %arg9: memref<1x1xf32, #tpu.memory_space<vmem>>) attributes {dimension_semantics = [#tpu.dimension_semantics<arbitrary>], iteration_bounds = array<i64: 2>, scalar_prefetch = 1 : i64, scratch_operands = 1 : i64, tpu.core_type = #tpu.core_type<tc>, window_params = [{transform_indices = @transform_0, window_bounds = array<i64: 1, 4, 192>}, {pipeline_mode = #tpu.pipeline_mode<synchronous>, transform_indices = @transform_1, window_bounds = array<i64: 192, 128>}, {pipeline_mode = #tpu.pipeline_mode<synchronous>, transform_indices = @transform_2, window_bounds = array<i64: 1, 128>}, {pipeline_mode = #tpu.pipeline_mode<synchronous>, transform_indices = @transform_3, window_bounds = array<i64: 128, 128>}, {pipeline_mode = #tpu.pipeline_mode<synchronous>, transform_indices = @transform_4, window_bounds = array<i64: 1, 128>}, {transform_indices = @transform_5, window_bounds = array<i64: 1, 2>}, {transform_indices = @transform_6, window_bounds = array<i64: 1, 1>}]} {
    %c0_i32 = arith.constant 0 : i32
    %0 = arith.cmpi eq, %arg0, %c0_i32 : i32
    %1 = arith.extui %0 : i1 to i32
    %c0_i32_0 = arith.constant 0 : i32
    %2 = arith.cmpi ne, %1, %c0_i32_0 : i32
    scf.if %2 {
      %cst_29 = arith.constant 0.000000e+00 : f32
      %63 = vector.broadcast %cst_29 : f32 to vector<1x1xf32>
      %c0_30 = arith.constant 0 : index
      %c0_31 = arith.constant 0 : index
      %64 = vector.load %arg9[%c0_30, %c0_31] : memref<1x1xf32, #tpu.memory_space<vmem>>, vector<1x1xf32>
      tpu.vector_store %arg9[%c0_30, %c0_31], %63 {strides = array<i32>} : memref<1x1xf32, #tpu.memory_space<vmem>>, vector<1x1xf32>,
    } else {
    }
    %c0 = arith.constant 0 : index
    %c0_1 = arith.constant 0 : index
    %c0_2 = arith.constant 0 : index
    %3 = vector.load %arg2[%c0, %c0_1, %c0_2] : memref<1x4x192xbf16, #tpu.memory_space<vmem>>, vector<1x4x192xbf16>
    %4 = vector.shape_cast %3 : vector<1x4x192xbf16> to vector<4x192xbf16>
    %c0_3 = arith.constant 0 : index
    %c0_4 = arith.constant 0 : index
    %5 = vector.load %arg3[%c0_3, %c0_4] : memref<192x128xbf16, #tpu.memory_space<vmem>>, vector<192x128xbf16>
    %cst = arith.constant dense<0.000000e+00> : vector<4x128xf32>
    %6 = tpu.matmul %4, %5, %cst {dimension_numbers = #tpu.dot_dimension_numbers<[1], [0], [0], [1], [0, 0, 1, 1], [], []>} : vector<4x192xbf16>, vector<192x128xbf16>, vector<4x128xf32> -> vector<4x128xf32>
    %c0_5 = arith.constant 0 : index
    %c0_6 = arith.constant 0 : index
    %7 = vector.load %arg4[%c0_5, %c0_6] : memref<1x128xf32, #tpu.memory_space<vmem>>, vector<1x128xf32>
    %8 = vector.broadcast %7 : vector<1x128xf32> to vector<4x128xf32>
    %9 = arith.addf %6, %8 : vector<4x128xf32>
    %10 = arith.mulf %9, %9 : vector<4x128xf32>
    %11 = arith.mulf %9, %10 : vector<4x128xf32>
    %cst_7 = arith.constant 4.471500e-02 : f32
    %12 = vector.broadcast %cst_7 : f32 to vector<4x128xf32>
    %13 = arith.mulf %12, %11 : vector<4x128xf32>
    %14 = arith.addf %9, %13 : vector<4x128xf32>
    %cst_8 = arith.constant 0.797884583 : f32
    %15 = vector.broadcast %cst_8 : f32 to vector<4x128xf32>
    %16 = arith.mulf %15, %14 : vector<4x128xf32>
    %17 = math.tanh %16 : vector<4x128xf32>
    %cst_9 = arith.constant 1.000000e+00 : f32
    %18 = vector.broadcast %cst_9 : f32 to vector<4x128xf32>
    %19 = arith.addf %18, %17 : vector<4x128xf32>
    %cst_10 = arith.constant 5.000000e-01 : f32
    %20 = vector.broadcast %cst_10 : f32 to vector<4x128xf32>
    %21 = arith.mulf %20, %19 : vector<4x128xf32>
    %22 = arith.mulf %9, %21 : vector<4x128xf32>
    %cst_11 = arith.constant dense<0.000000e+00> : vector<128xf32>
    %23 = vector.multi_reduction <add>, %22, %cst_11 [0] : vector<4x128xf32> to vector<128xf32>
    %24 = vector.shape_cast %23 : vector<128xf32> to vector<1x128xf32>
    %cst_12 = arith.constant 2.500000e-01 : f32
    %25 = vector.broadcast %cst_12 : f32 to vector<1x128xf32>
    %26 = arith.mulf %24, %25 : vector<1x128xf32>
    %27 = arith.truncf %26 : vector<1x128xf32> to vector<1x128xbf16>
    %c0_13 = arith.constant 0 : index
    %c0_14 = arith.constant 0 : index
    %28 = vector.load %arg5[%c0_13, %c0_14] : memref<128x128xbf16, #tpu.memory_space<vmem>>, vector<128x128xbf16>
    %cst_15 = arith.constant dense<0.000000e+00> : vector<1x128xf32>
    %29 = tpu.matmul %27, %28, %cst_15 {dimension_numbers = #tpu.dot_dimension_numbers<[1], [0], [0], [1], [0, 0, 1, 1], [], []>} : vector<1x128xbf16>, vector<128x128xbf16>, vector<1x128xf32> -> vector<1x128xf32>
    %c0_16 = arith.constant 0 : index
    %c0_17 = arith.constant 0 : index
    %30 = vector.load %arg6[%c0_16, %c0_17] : memref<1x128xf32, #tpu.memory_space<vmem>>, vector<1x128xf32>
    %31 = arith.addf %29, %30 : vector<1x128xf32>
    %cst_18 = arith.constant dense<0xFF800000> : vector<1xf32>
    %32 = vector.multi_reduction <maximumf>, %31, %cst_18 [1] : vector<1x128xf32> to vector<1xf32>
    %33 = vector.shape_cast %32 : vector<1xf32> to vector<1x1xf32>
    %34 = vector.broadcast %33 : vector<1x1xf32> to vector<1x128xf32>
    %35 = arith.subf %31, %34 : vector<1x128xf32>
    %36 = math.exp %35 : vector<1x128xf32>
    %cst_19 = arith.constant dense<0.000000e+00> : vector<1xf32>
    %37 = vector.multi_reduction <add>, %36, %cst_19 [1] : vector<1x128xf32> to vector<1xf32>
    %38 = vector.shape_cast %37 : vector<1xf32> to vector<1x1xf32>
    %39 = math.log %38 : vector<1x1xf32>
    %40 = arith.addf %39, %33 : vector<1x1xf32>
    %41 = tpu.iota {dimensions = array<i32: 1>} : vector<1x128xi32>
    %42 = arith.index_cast %arg0 : i32 to index
    %43 = memref.load %arg1[%42] : memref<2xi32, #tpu.memory_space<smem>>
    %44 = vector.broadcast %43 : i32 to vector<1x128xi32>
    %45 = arith.cmpi eq, %41, %44 : vector<1x128xi32>
    %cst_20 = arith.constant 0.000000e+00 : f32
    %46 = vector.broadcast %cst_20 : f32 to vector<1x128xf32>
    %47 = arith.select %45, %31, %46 : vector<1x128xi1>, vector<1x128xf32>
    %cst_21 = arith.constant dense<0.000000e+00> : vector<1xf32>
    %48 = vector.multi_reduction <add>, %47, %cst_21 [1] : vector<1x128xf32> to vector<1xf32>
    %49 = vector.shape_cast %48 : vector<1xf32> to vector<1x1xf32>
    %50 = arith.subf %40, %49 : vector<1x1xf32>
    %51 = vector.shape_cast %50 : vector<1x1xf32> to vector<1x1x1xf32>
    %cst_22 = arith.constant dense<0.000000e+00> : vector<1xf32>
    %52 = vector.multi_reduction <add>, %51, %cst_22 [1, 2] : vector<1x1x1xf32> to vector<1xf32>
    %53 = vector.shape_cast %52 : vector<1xf32> to vector<1x1x1xf32>
    %54 = vector.extract %53[0, 0, 0] : f32 from vector<1x1x1xf32>
    %c0_23 = arith.constant 0 : index
    %55 = arith.index_cast %arg0 : i32 to index
    %56 = memref.load %arg7[%c0_23, %55] : memref<1x2xf32, #tpu.memory_space<smem>>
    memref.store %54, %arg7[%c0_23, %55] : memref<1x2xf32, #tpu.memory_space<smem>>
    %c0_24 = arith.constant 0 : index
    %c0_25 = arith.constant 0 : index
    %57 = vector.load %arg9[%c0_24, %c0_25] : memref<1x1xf32, #tpu.memory_space<vmem>>, vector<1x1xf32>
    %58 = arith.addf %57, %50 : vector<1x1xf32>
    %c0_26 = arith.constant 0 : index
    %c0_27 = arith.constant 0 : index
    %59 = vector.load %arg9[%c0_26, %c0_27] : memref<1x1xf32, #tpu.memory_space<vmem>>, vector<1x1xf32>
    tpu.vector_store %arg9[%c0_26, %c0_27], %58 {strides = array<i32>} : memref<1x1xf32, #tpu.memory_space<vmem>>, vector<1x1xf32>,
    %c1_i32 = arith.constant 1 : i32
    %60 = arith.cmpi eq, %arg0, %c1_i32 : i32
    %61 = arith.extui %60 : i1 to i32
    %c0_i32_28 = arith.constant 0 : i32
    %62 = arith.cmpi ne, %61, %c0_i32_28 : i32
    scf.if %62 {
      %c0_29 = arith.constant 0 : index
      %c0_30 = arith.constant 0 : index
      %63 = vector.load %arg9[%c0_29, %c0_30] : memref<1x1xf32, #tpu.memory_space<vmem>>, vector<1x1xf32>
      %64 = vector.shape_cast %63 : vector<1x1xf32> to vector<1x1x1xf32>
      %cst_31 = arith.constant dense<0.000000e+00> : vector<1xf32>
      %65 = vector.multi_reduction <add>, %64, %cst_31 [1, 2] : vector<1x1x1xf32> to vector<1xf32>
      %66 = vector.shape_cast %65 : vector<1xf32> to vector<1x1x1xf32>
      %67 = vector.extract %66[0, 0, 0] : f32 from vector<1x1x1xf32>
      %cst_32 = arith.constant 5.000000e-01 : f32
      %68 = arith.mulf %67, %cst_32 : f32
      %c0_33 = arith.constant 0 : index
      %c0_34 = arith.constant 0 : index
      %69 = memref.load %arg8[%c0_33, %c0_34] : memref<1x1xf32, #tpu.memory_space<smem>>
      memref.store %68, %arg8[%c0_33, %c0_34] : memref<1x1xf32, #tpu.memory_space<smem>>
    } else {
    }
    return
  }
  func.func @transform_0(%arg0: i32, %arg1: memref<2xi32, #tpu.memory_space<smem>>) -> (i32, i32, i32) {
    %c0_i32 = arith.constant 0 : i32
    %c0_i32_0 = arith.constant 0 : i32
    %c0_i32_1 = arith.constant 0 : i32
    return %arg0, %c0_i32, %c0_i32_0 : i32, i32, i32
  }
  func.func @transform_1(%arg0: i32, %arg1: memref<2xi32, #tpu.memory_space<smem>>) -> (i32, i32) {
    %c0_i32 = arith.constant 0 : i32
    %c0_i32_0 = arith.constant 0 : i32
    %c0_i32_1 = arith.constant 0 : i32
    return %c0_i32, %c0_i32_0 : i32, i32
  }
  func.func @transform_2(%arg0: i32, %arg1: memref<2xi32, #tpu.memory_space<smem>>) -> (i32, i32) {
    %c0_i32 = arith.constant 0 : i32
    %c0_i32_0 = arith.constant 0 : i32
    %c0_i32_1 = arith.constant 0 : i32
    return %c0_i32, %c0_i32_0 : i32, i32
  }
  func.func @transform_3(%arg0: i32, %arg1: memref<2xi32, #tpu.memory_space<smem>>) -> (i32, i32) {
    %c0_i32 = arith.constant 0 : i32
    %c0_i32_0 = arith.constant 0 : i32
    %c0_i32_1 = arith.constant 0 : i32
    return %c0_i32, %c0_i32_0 : i32, i32
  }
  func.func @transform_4(%arg0: i32, %arg1: memref<2xi32, #tpu.memory_space<smem>>) -> (i32, i32) {
    %c0_i32 = arith.constant 0 : i32
    %c0_i32_0 = arith.constant 0 : i32
    %c0_i32_1 = arith.constant 0 : i32
    return %c0_i32, %c0_i32_0 : i32, i32
  }
  func.func @transform_5(%arg0: i32, %arg1: memref<2xi32, #tpu.memory_space<smem>>) -> (i32, i32) {
    %c0_i32 = arith.constant 0 : i32
    %c0_i32_0 = arith.constant 0 : i32
    %c0_i32_1 = arith.constant 0 : i32
    return %c0_i32, %c0_i32_0 : i32, i32
  }
  func.func @transform_6(%arg0: i32, %arg1: memref<2xi32, #tpu.memory_space<smem>>) -> (i32, i32) {
    %c0_i32 = arith.constant 0 : i32
    %c0_i32_0 = arith.constant 0 : i32
    %c0_i32_1 = arith.constant 0 : i32
    return %c0_i32, %c0_i32_0 : i32, i32
  }
}

</mosaic_0001>

<llo_original>
// kernel: tpu_custom_call.1
$region0: #{tpu_custom_call.1}
  #allocation0 [shape = 'u32[]', space=smem, size = 0x4, offset = 0x4, fixed_abs, tag = 'smem constant byte address 0x4 - core index']
  #allocation1 [shape = 'u32[144,128]{1,0:T(1,128)}', space=vmem, size = 0x12000, scoped, tag = 'internal scratch']
  #allocation2 [shape = 'f32[1,1]{1,0:T(1,128)}', space=vmem, size = 0x200, scoped, tag = 'scratch operand']
  #allocation3 [shape = 's32[1]{0}', space=sflag, size = 0x4, scoped, tag = 'scoped memory for tpu_custom_call.1']
  #allocation4 [shape = 'u8[512]{0}', space=smem, size = 0x200, scoped, tag = 'prefetched SMEM operand 0']
  %s0 = inlined_call_operand.hbm [shape: s32[2], index: 0, kind: input, shape index: {}]
  %s1 = inlined_call_operand.hbm [shape: bf16[2,4,192], index: 1, kind: input, shape index: {}]
  %s2 = inlined_call_operand.hbm [shape: bf16[192,128], index: 2, kind: input, shape index: {}]
  %s3 = inlined_call_operand.vmem [shape: f32[1,128], index: 3, kind: input, shape index: {}]
  %s4 = inlined_call_operand.hbm [shape: bf16[128,128], index: 4, kind: input, shape index: {}]
  %s5 = inlined_call_operand.vmem [shape: f32[1,128], index: 5, kind: input, shape index: {}]
  %s6 = inlined_call_operand.hbm [shape: f32[1,2], index: 6, kind: output, shape index: {0}]
  %s7 = inlined_call_operand.hbm [shape: f32[1,1], index: 7, kind: output, shape index: {1}]
  %8 = xla_tuple %s6, %s7
  %s9 = sld [smem:[#allocation0]]
  $region81: #{tpu_custom_call.1} parent=0
    _
  %s11 = ssub.s32 1, %s9
  %s12 = scalar_select 0, %s11, %s9
  %14 = dma.hbm_to_smem %s0, 16, [#allocation4], [#allocation3]
  %15 = dma.done [#allocation3], 16
  %16 = sfence
  $region1: #{tpu_custom_call.1} parent=0
    #allocation5 [shape = 'u8[4096]{0}', space=vmem, size = 0x1000, scoped, tag = 'input window, operand 1']
    #allocation6 [shape = 's32[2]{0}', space=sflag, size = 0x8, scoped, tag = 'scoped memory for tpu_custom_call.1']
    #allocation7 [shape = 's32[2]{0}', space=sflag, size = 0x8, scoped, tag = 'scoped memory for tpu_custom_call.1']
    #allocation8 [shape = 'u8[49152]{0}', space=vmem, size = 0xc000, scoped, tag = 'input window, operand 2, single buffered']
    #allocation9 [shape = 's32[1]{0}', space=sflag, size = 0x4, scoped, tag = 'scoped memory for tpu_custom_call.1']
    #allocation10 [shape = 'u8[32768]{0}', space=vmem, size = 0x8000, scoped, tag = 'input window, operand 4, single buffered']
    #allocation11 [shape = 'u8[512]{0}', space=smem, size = 0x200, scoped, tag = 'output window, operand 0, single buffered']
    #allocation12 [shape = 'u8[512]{0}', space=smem, size = 0x200, scoped, tag = 'output window, operand 1, single buffered']
    #allocation13 [shape = 's32[1]{0}', space=sflag, size = 0x4, scoped, tag = 'scoped memory for tpu_custom_call.1']
    %17 = vsyncpa [#allocation6], 0
    %s18 = scalar_lea.sflag [#allocation6], 1
    %19 = vsyncpa %s18, 0
    %20 = vsyncpa [#allocation9], 0
    %21 = vsyncpa [#allocation7], 0
    %22 = vsyncpa [#allocation13], 0
    loop: start=0, step=1, limit=4
    $region2: #{tpu_custom_call.1} parent=1 // loop_pre_header
      _
    $region3: #{tpu_custom_call.1} parent=1 // loop_header
      %s24 = sphi 0, %s28
      %p25 = scmp.ge.s32.totalorder %s24, 4
      %s34 = sphi 0, %s36
      %s37 = sphi 0, %s34
      %s38 = sphi 0, %s37
      %s54 = sphi 0, %s38
      %s58 = sphi 0, %s58
      %s60 = sphi 0, %s58
      %s61 = sphi 0, %s60
      %s75 = sphi 0, %s61
      %s79 = sphi 0, %s79
      %s81 = sphi 0, %s79
      %s82 = sphi 0, %s81
      %s96 = sphi 0, %s82
      %s100 = sphi 0, %s100
      %s102 = sphi 0, %s100
      %s103 = sphi 0, %s102
      %s117 = sphi 0, %s103
      %s121 = sphi 0, %s121
      %s123 = sphi 0, %s121
      %s124 = sphi 0, %s123
      %s138 = sphi 0, %s124
      %s142 = sphi 0, %s142
      %s144 = sphi 0, %s142
      %s145 = sphi 0, %s144
      %s159 = sphi 0, %s145
      %s163 = sphi 0, %s163
      %s165 = sphi 0, %s163
      %s166 = sphi 0, %s165
      %s180 = sphi 0, %s166
    $region4: #{tpu_custom_call.1} parent=1 // loop_header_branch
      %27 = sbr.rel (%p25) target = $region8
    $region5: #{tpu_custom_call.1} parent=1 // loop_body
      %s29 = ssub.s32 %s24, 1
      %s30 = ssub.s32 %s24, 2
      %s31 = sadd.s32 %s24, 1
      %s32 = ssub.s32 %s24, %s31
      %p33 = scmp.eq.s32.totalorder %s32, 0
      %s35 = sadd.s32 %s34, 1
      %s36 = scalar_select %p33, %s34, %s35
      %p39 = pneg %p33
      %p40 = scmp.eq.s32.totalorder %s24, 1
      %p41 = por %p39, %p40
      %p42 = scmp.ne.s32.totalorder %s34, %s37
      %p43 = scmp.eq.s32.totalorder %s24, 0
      %p44 = por %p42, %p43
      %p45 = scmp.ne.s32.totalorder %s34, %s37
      %p46 = scmp.eq.s32.totalorder %s29, 1
      %p47 = por %p45, %p46
      %p48 = scmp.ne.s32.totalorder %s37, %s38
      %p49 = scmp.eq.s32.totalorder %s29, 0
      %p50 = por %p48, %p49
      %p51 = scmp.ne.s32.totalorder %s37, %s38
      %p52 = scmp.eq.s32.totalorder %s30, 1
      %p53 = por %p51, %p52
      %p55 = scmp.ne.s32.totalorder %s38, %s54
      %p56 = scmp.eq.s32.totalorder %s30, 0
      %p57 = por %p55, %p56
      %s59 = sadd.s32 %s58, 1
      %p62 = scmp.eq.s32.totalorder %s24, 1
      %p63 = scmp.ne.s32.totalorder %s58, %s60
      %p64 = scmp.eq.s32.totalorder %s24, 0
      %p65 = por %p63, %p64
      %p66 = scmp.ne.s32.totalorder %s58, %s60
      %p67 = scmp.eq.s32.totalorder %s29, 1
      %p68 = por %p66, %p67
      %p69 = scmp.ne.s32.totalorder %s60, %s61
      %p70 = scmp.eq.s32.totalorder %s29, 0
      %p71 = por %p69, %p70
      %p72 = scmp.ne.s32.totalorder %s60, %s61
      %p73 = scmp.eq.s32.totalorder %s30, 1
      %p74 = por %p72, %p73
      %p76 = scmp.ne.s32.totalorder %s61, %s75
      %p77 = scmp.eq.s32.totalorder %s30, 0
      %p78 = por %p76, %p77
      %s80 = sadd.s32 %s79, 1
      %p83 = scmp.eq.s32.totalorder %s24, 1
      %p84 = scmp.ne.s32.totalorder %s79, %s81
      %p85 = scmp.eq.s32.totalorder %s24, 0
      %p86 = por %p84, %p85
      %p87 = scmp.ne.s32.totalorder %s79, %s81
      %p88 = scmp.eq.s32.totalorder %s29, 1
      %p89 = por %p87, %p88
      %p90 = scmp.ne.s32.totalorder %s81, %s82
      %p91 = scmp.eq.s32.totalorder %s29, 0
      %p92 = por %p90, %p91
      %p93 = scmp.ne.s32.totalorder %s81, %s82
      %p94 = scmp.eq.s32.totalorder %s30, 1
      %p95 = por %p93, %p94
      %p97 = scmp.ne.s32.totalorder %s82, %s96
      %p98 = scmp.eq.s32.totalorder %s30, 0
      %p99 = por %p97, %p98
      %s101 = sadd.s32 %s100, 1
      %p104 = scmp.eq.s32.totalorder %s24, 1
      %p105 = scmp.ne.s32.totalorder %s100, %s102
      %p106 = scmp.eq.s32.totalorder %s24, 0
      %p107 = por %p105, %p106
      %p108 = scmp.ne.s32.totalorder %s100, %s102
      %p109 = scmp.eq.s32.totalorder %s29, 1
      %p110 = por %p108, %p109
      %p111 = scmp.ne.s32.totalorder %s102, %s103
      %p112 = scmp.eq.s32.totalorder %s29, 0
      %p113 = por %p111, %p112
      %p114 = scmp.ne.s32.totalorder %s102, %s103
      %p115 = scmp.eq.s32.totalorder %s30, 1
      %p116 = por %p114, %p115
      %p118 = scmp.ne.s32.totalorder %s103, %s117
      %p119 = scmp.eq.s32.totalorder %s30, 0
      %p120 = por %p118, %p119
      %s122 = sadd.s32 %s121, 1
      %p125 = scmp.eq.s32.totalorder %s24, 1
      %p126 = scmp.ne.s32.totalorder %s121, %s123
      %p127 = scmp.eq.s32.totalorder %s24, 0
      %p128 = por %p126, %p127
      %p129 = scmp.ne.s32.totalorder %s121, %s123
      %p130 = scmp.eq.s32.totalorder %s29, 1
      %p131 = por %p129, %p130
      %p132 = scmp.ne.s32.totalorder %s123, %s124
      %p133 = scmp.eq.s32.totalorder %s29, 0
      %p134 = por %p132, %p133
      %p135 = scmp.ne.s32.totalorder %s123, %s124
      %p136 = scmp.eq.s32.totalorder %s30, 1
      %p137 = por %p135, %p136
      %p139 = scmp.ne.s32.totalorder %s124, %s138
      %p140 = scmp.eq.s32.totalorder %s30, 0
      %p141 = por %p139, %p140
      %s143 = sadd.s32 %s142, 1
      %p146 = scmp.eq.s32.totalorder %s24, 1
      %p147 = scmp.ne.s32.totalorder %s142, %s144
      %p148 = scmp.eq.s32.totalorder %s24, 0
      %p149 = por %p147, %p148
      %p150 = scmp.ne.s32.totalorder %s142, %s144
      %p151 = scmp.eq.s32.totalorder %s29, 1
      %p152 = por %p150, %p151
      %p153 = scmp.ne.s32.totalorder %s144, %s145
      %p154 = scmp.eq.s32.totalorder %s29, 0
      %p155 = por %p153, %p154
      %p156 = scmp.ne.s32.totalorder %s144, %s145
      %p157 = scmp.eq.s32.totalorder %s30, 1
      %p158 = por %p156, %p157
      %p160 = scmp.ne.s32.totalorder %s145, %s159
      %p161 = scmp.eq.s32.totalorder %s30, 0
      %p162 = por %p160, %p161
      %s164 = sadd.s32 %s163, 1
      %p167 = scmp.eq.s32.totalorder %s24, 1
      %p168 = scmp.ne.s32.totalorder %s163, %s165
      %p169 = scmp.eq.s32.totalorder %s24, 0
      %p170 = por %p168, %p169
      %p171 = scmp.ne.s32.totalorder %s163, %s165
      %p172 = scmp.eq.s32.totalorder %s29, 1
      %p173 = por %p171, %p172
      %p174 = scmp.ne.s32.totalorder %s165, %s166
      %p175 = scmp.eq.s32.totalorder %s29, 0
      %p176 = por %p174, %p175
      %p177 = scmp.ne.s32.totalorder %s165, %s166
      %p178 = scmp.eq.s32.totalorder %s30, 1
      %p179 = por %p177, %p178
      %p181 = scmp.ne.s32.totalorder %s166, %s180
      %p182 = scmp.eq.s32.totalorder %s30, 0
      %p183 = por %p181, %p182
      %p184 = scmp.le.s32.totalorder 1, %s24
      %p185 = scmp.lt.s32.totalorder %s24, 3
      %p186 = pnand %p184, %p185
      %p187 = pneg %p186
      // Predicated region
      $region9: #{tpu_custom_call.1} parent=5 // pred_check
        _
      $region10: #{tpu_custom_call.1} parent=5 // pred_check_branch
        %189 = sbr.rel (%p186) target = $region12
      $region11: #{tpu_custom_call.1} parent=5 // pred_region
        %s190 = ssub.s32 %s24, 1
        // Predicated region
        $region13: #{tpu_custom_call.1} parent=11 // pred_check
          %p191 = pneg %p71
        $region14: #{tpu_custom_call.1} parent=11 // pred_check_branch
          %193 = sbr.rel (%p191) target = $region16
        $region15: #{tpu_custom_call.1} parent=11 // pred_region
          %s195 = ssub.s32 1536, 1536
          %196 = vsyncadd [#allocation9], %s195
          %s197 = sshll.u32 [#allocation8], 4
          %s198 = int_to_ptr.vmem [resolvable:$true] %s197
          %203 = dma.hbm_to_vmem [thread:$0]  %s2, 1536, %s198, [#allocation9], 64, 64, 4
        $region16: #{tpu_custom_call.1} parent=11 // pred_fallthru
          _
        // Predicated region
        $region17: #{tpu_custom_call.1} parent=11 // pred_check
          %p204 = pneg %p92
        $region18: #{tpu_custom_call.1} parent=11 // pred_check_branch
          %206 = sbr.rel (%p204) target = $region20
        $region19: #{tpu_custom_call.1} parent=11 // pred_region
          _
        $region20: #{tpu_custom_call.1} parent=11 // pred_fallthru
          _
        // Predicated region
        $region21: #{tpu_custom_call.1} parent=11 // pred_check
          %p207 = pneg %p113
        $region22: #{tpu_custom_call.1} parent=11 // pred_check_branch
          %209 = sbr.rel (%p207) target = $region24
        $region23: #{tpu_custom_call.1} parent=11 // pred_region
          %s211 = ssub.s32 1024, 1024
          %212 = vsyncadd [#allocation9], %s211
          %s213 = sshll.u32 [#allocation10], 4
          %s214 = int_to_ptr.vmem [resolvable:$true] %s213
          %219 = dma.hbm_to_vmem [thread:$0]  %s4, 1024, %s214, [#allocation9], 64, 64, 4
        $region24: #{tpu_custom_call.1} parent=11 // pred_fallthru
          _
        // Predicated region
        $region25: #{tpu_custom_call.1} parent=11 // pred_check
          %p220 = pneg %p134
        $region26: #{tpu_custom_call.1} parent=11 // pred_check_branch
          %222 = sbr.rel (%p220) target = $region28
        $region27: #{tpu_custom_call.1} parent=11 // pred_region
          _
        $region28: #{tpu_custom_call.1} parent=11 // pred_fallthru
          _
      $region12: #{tpu_custom_call.1} parent=5 // pred_fallthru
        _
      %p223 = scmp.lt.s32.totalorder %s24, 2
      // Predicated region
      $region29: #{tpu_custom_call.1} parent=5 // pred_check
        %p224 = pneg %p223
      $region30: #{tpu_custom_call.1} parent=5 // pred_check_branch
        %226 = sbr.rel (%p224) target = $region32
      $region31: #{tpu_custom_call.1} parent=5 // pred_region
        // Predicated region
        $region33: #{tpu_custom_call.1} parent=31 // pred_check
          %p227 = pneg %p44
        $region34: #{tpu_custom_call.1} parent=31 // pred_check_branch
          %229 = sbr.rel (%p227) target = $region36
        $region35: #{tpu_custom_call.1} parent=31 // pred_region
          %s230 = sand.u32 %s34, 1
          %s231 = scalar_lea.sflag [#allocation6], %s230
          %s232 = sand.u32 %s34, 1
          %s233 = smul.addr %s232, 4
          %s234 = scalar_lea.vmem [#allocation5], %s233
          %s236 = ssub.s32 64, 64
          %237 = vsyncadd %s231, %s236
          %s238 = smul.addr %s24, 2
          %s239 = smul.addr %s238, 32
          %s240 = scalar_lea.hbm %s1, %s239
          %s242 = sshll.u32 %s234, 4
          %s243 = int_to_ptr.vmem [resolvable:$true] %s242
          %245 = dma.hbm_to_vmem [thread:$0]  %s240, 64, %s243, %s231
        $region36: #{tpu_custom_call.1} parent=31 // pred_fallthru
          _
      $region32: #{tpu_custom_call.1} parent=5 // pred_fallthru
        _
      %p246 = scmp.le.s32.totalorder 1, %s24
      %p247 = scmp.lt.s32.totalorder %s24, 3
      %p248 = pnand %p246, %p247
      %p249 = pneg %p248
      // Predicated region
      $region37: #{tpu_custom_call.1} parent=5 // pred_check
        _
      $region38: #{tpu_custom_call.1} parent=5 // pred_check_branch
        %251 = sbr.rel (%p248) target = $region40
      $region39: #{tpu_custom_call.1} parent=5 // pred_region
        %s252 = ssub.s32 %s24, 1
        %s253 = sand.u32 %s37, 1
        %s254 = scalar_lea.sflag [#allocation6], %s253
        %s255 = sand.u32 %s37, 1
        %s256 = smul.addr %s255, 4
        %s257 = scalar_lea.vmem [#allocation5], %s256
        // Predicated region
        $region41: #{tpu_custom_call.1} parent=39 // pred_check
          %p258 = pneg %p50
        $region42: #{tpu_custom_call.1} parent=39 // pred_check_branch
          %260 = sbr.rel (%p258) target = $region44
        $region43: #{tpu_custom_call.1} parent=39 // pred_region
          %261 = dma.done %s254, 64
        $region44: #{tpu_custom_call.1} parent=39 // pred_fallthru
          _
        // Predicated region
        $region45: #{tpu_custom_call.1} parent=39 // pred_check
          %p262 = pneg %p71
        $region46: #{tpu_custom_call.1} parent=39 // pred_check_branch
          %264 = sbr.rel (%p262) target = $region48
        $region47: #{tpu_custom_call.1} parent=39 // pred_region
          %265 = dma.done [#allocation9], 1536
        $region48: #{tpu_custom_call.1} parent=39 // pred_fallthru
          _
        // Predicated region
        $region49: #{tpu_custom_call.1} parent=39 // pred_check
          %p266 = pneg %p113
        $region50: #{tpu_custom_call.1} parent=39 // pred_check_branch
          %268 = sbr.rel (%p266) target = $region52
        $region51: #{tpu_custom_call.1} parent=39 // pred_region
          %269 = dma.done [#allocation9], 1024
        $region52: #{tpu_custom_call.1} parent=39 // pred_fallthru
          _
        %s270 = sand.u32 %s37, 1
        %s271 = scalar_lea.sflag [#allocation6], %s270
        %s272 = sand.u32 %s37, 1
        %s273 = smul.addr %s272, 4
        %s274 = scalar_lea.vmem [#allocation5], %s273
        %p275 = pneg %p50
        %p276 = pneg %p47
        %p277 = pneg %p71
        %p278 = pneg %p68
        %p279 = pneg %p92
        %p280 = pneg %p89
        %p281 = pneg %p113
        %p282 = pneg %p110
        %p283 = pneg %p134
        %p284 = pneg %p131
        %p285 = pneg %p155
        %p286 = pneg %p152
        %p287 = pneg %p176
        %p288 = pneg %p173
        %p290 = scmp.eq.s32.totalorder %s29, 0
        // Predicated region
        $region53: #{tpu_custom_call.1} parent=39 // pred_check
          %p291 = pneg %p290
        $region54: #{tpu_custom_call.1} parent=39 // pred_check_branch
          %293 = sbr.rel (%p291) target = $region56
        $region55: #{tpu_custom_call.1} parent=39 // pred_region
          %vm294 = vcmask 0
          %295 = vst.msk [vmem:[#allocation2] sm:$0x1] %vm294, 0.0
        $region56: #{tpu_custom_call.1} parent=39 // pred_fallthru
          _
        %v296 = vld [vmem:[%s257] sm:$0xf]
        %v297 = vld [vmem:[#allocation8] sm:$0xf]
        %v298 = vld [vmem:[#allocation8 + $0x4] sm:$0xf]
        %v299 = vld [vmem:[#allocation8 + $0x8] sm:$0xf]
        %v300 = vld [vmem:[#allocation8 + $0xc] sm:$0xf]
        %v301 = vld [vmem:[#allocation8 + $0x10] sm:$0xf]
        %v302 = vld [vmem:[#allocation8 + $0x14] sm:$0xf]
        %v303 = vld [vmem:[#allocation8 + $0x18] sm:$0xf]
        %v304 = vld [vmem:[#allocation8 + $0x1c] sm:$0xf]
        %v305 = vld [vmem:[#allocation8 + $0x20] sm:$0xf]
        %v306 = vld [vmem:[#allocation8 + $0x24] sm:$0xf]
        %v307 = vld [vmem:[#allocation8 + $0x28] sm:$0xf]
        %v308 = vld [vmem:[#allocation8 + $0x2c] sm:$0xf]
        %v309 = vld [vmem:[#allocation8 + $0x30] sm:$0xf]
        %v310 = vld [vmem:[#allocation8 + $0x34] sm:$0xf]
        %v311 = vld [vmem:[#allocation8 + $0x38] sm:$0xf]
        %v312 = vld [vmem:[#allocation8 + $0x3c] sm:$0xf]
        %v313 = vld [vmem:[#allocation8 + $0x40] sm:$0xf]
        %v314 = vld [vmem:[#allocation8 + $0x44] sm:$0xf]
        %v315 = vld [vmem:[#allocation8 + $0x48] sm:$0xf]
        %v316 = vld [vmem:[#allocation8 + $0x4c] sm:$0xf]
        %v317 = vld [vmem:[#allocation8 + $0x50] sm:$0xf]
        %v318 = vld [vmem:[#allocation8 + $0x54] sm:$0xf]
        %v319 = vld [vmem:[#allocation8 + $0x58] sm:$0xf]
        %v320 = vld [vmem:[#allocation8 + $0x5c] sm:$0xf]
        %v321 = vld [vmem:[%s3] sm:$0x1]
        %v323 = vlaneseq
        %v324 = vshrl.u32 %v323, 7
        %v325 = vsub.s32 0, %v324
        %v326 = vrot.slane %v321, %v325
        %v330 = vunpack.c.l.s4 1983009808
        %v331 = vunpack.c.0.s8 %v330
        %v332 = vlaneseq
        %v333 = vshrl.u32 %v332, 7
        %v334 = vsub.s32 %v331, %v333
        %v335 = vrot.slane %v296, %v334
        %v336 = vcombine.high %v335, %v335
        %v362 = vunpack.c.l.b16 %v297
        %v363 = vunpack.c.l.b16 %v298
        %v364 = vunpack.c.l.b16 %v299
        %v365 = vunpack.c.l.b16 %v300
        %v366 = vunpack.c.l.b16 %v301
        %v367 = vunpack.c.l.b16 %v302
        %v368 = vunpack.c.l.b16 %v303
        %v369 = vunpack.c.l.b16 %v304
        %v370 = vunpack.c.l.b16 %v305
        %v371 = vunpack.c.l.b16 %v306
        %v372 = vunpack.c.l.b16 %v307
        %v373 = vunpack.c.l.b16 %v308
        %v374 = vunpack.c.l.b16 %v309
        %v375 = vunpack.c.l.b16 %v310
        %v376 = vunpack.c.l.b16 %v311
        %v377 = vunpack.c.l.b16 %v312
        %v378 = vunpack.c.l.b16 %v313
        %v379 = vunpack.c.l.b16 %v314
        %v380 = vunpack.c.l.b16 %v315
        %v381 = vunpack.c.l.b16 %v316
        %v382 = vunpack.c.l.b16 %v317
        %v383 = vunpack.c.l.b16 %v318
        %v384 = vunpack.c.l.b16 %v319
        %v385 = vunpack.c.l.b16 %v320
        %v386 = vpack.c.b16 %v363, %v362
        %v387 = vpack.c.b16 %v365, %v364
        %v388 = vpack.c.b16 %v367, %v366
        %v389 = vpack.c.b16 %v369, %v368
        %v390 = vpack.c.b16 %v371, %v370
        %v391 = vpack.c.b16 %v373, %v372
        %v392 = vpack.c.b16 %v375, %v374
        %v393 = vpack.c.b16 %v377, %v376
        %v394 = vpack.c.b16 %v379, %v378
        %v395 = vpack.c.b16 %v381, %v380
        %v396 = vpack.c.b16 %v383, %v382
        %v397 = vpack.c.b16 %v385, %v384
        %vm410 = vcmask 523264
        %v412 = vsel %vm410, %v336, 0
        %414 = vmatprep.subr.bf16.mxu0 0
        %415 = vmatpush1.bf16.msra.mxu0 %v386
        %416 = vmatprep.subr.bf16.mxu0 0
        %417 = vmatpush1.bf16.msra.mxu0 %v387
        %418 = vmatprep.subr.bf16.mxu0 0
        %419 = vmatpush1.bf16.msra.mxu0 %v388
        %420 = vmatprep.subr.bf16.mxu0 0
        %421 = vmatpush1.bf16.msra.mxu0 %v389
        %422 = vmatprep.subr.bf16.mxu0 0
        %423 = vmatpush1.bf16.msra.mxu0 %v390
        %424 = vmatprep.subr.bf16.mxu0 0
        %425 = vmatpush1.bf16.msra.mxu0 %v391
        %426 = vmatprep.subr.bf16.mxu0 0
        %427 = vmatpush1.bf16.msra.mxu0 %v392
        %428 = vmatprep.subr.bf16.mxu0 0
        %429 = vmatpush1.bf16.msra.mxu0 %v393
        %430 = vmatprep.subr.bf16.mxu0 0
        %431 = vmatpush1.bf16.msra.mxu0 %v394
        %432 = vmatprep.subr.bf16.mxu0 0
        %433 = vmatpush1.bf16.msra.mxu0 %v395
        %434 = vmatprep.subr.bf16.mxu0 0
        %435 = vmatpush1.bf16.msra.mxu0 %v396
        %436 = vmatprep.subr.bf16.mxu0 0
        %437 = vmatpush1.bf16.msra.mxu0 %v397
        %438 = vmatprep.subr.bf16.mxu0 0
        %439 = vmatpush1.bf16.msra.mxu0 0
        %440 = vmatprep.subr.bf16.mxu0 0
        %441 = vmatpush1.bf16.msra.mxu0 0
        %442 = vmatprep.subr.bf16.mxu0 0
        %443 = vmatpush1.bf16.msra.mxu0 0
        %444 = vmatprep.subr.bf16.mxu0 0
        %445 = vmatpush1.bf16.msra.mxu0 0
        %446 = vmatprep.mubr.bf16.mxu0 %v412
        %447 = vmatmul.mubr.bf16.gmra.mrb[0].mxu0 %v335
        %v448 = vpop.f32.mrb[0].mxu0
        %v449 = vadd.f32 %v326, %v448
        %v450 = vpop.f32.mrb[0].mxu0
        %v451 = vpop.f32.mrb[0].mxu0
        %v452 = vpop.f32.mrb[0].mxu0
        %453 = vdwg.mxu0
        %v454 = vmul.f32 %v449, %v449
        %v455 = vmul.f32 %v449, %v454
        %v456 = vmul.f32 %v455, 0.044715
        %v457 = vadd.f32 %v449, %v456
        %v458 = vmul.f32 %v457, 0.7978846
        %v459 = vtanh.pop %v458
        %v460 = vadd.f32 %v459, 1.0
        %v461 = vmul.f32 %v460, 0.5
        %v462 = vmul.f32 %v449, %v461
        %vm463 = vcmask 1043456
        %v464 = vsel %vm463, %v462, 0.0
        %v465 = vrot.slane %v464, 4
        %v466 = vadd.f32 %v464, %v465
        %v467 = vrot.slane %v466, 2
        %v468 = vadd.f32 %v466, %v467
        %v469 = vrot.slane %v468, 1
        %v470 = vadd.f32 %v468, %v469
        %v471 = vmul.f32 %v470, 0.25
        %v472 = vpack.c.bf16 %v471, %v471
        %v473 = vld [vmem:[#allocation10] sm:$0xf]
        %v474 = vld [vmem:[#allocation10 + $0x4] sm:$0xf]
        %v475 = vld [vmem:[#allocation10 + $0x8] sm:$0xf]
        %v476 = vld [vmem:[#allocation10 + $0xc] sm:$0xf]
        %v477 = vld [vmem:[#allocation10 + $0x10] sm:$0xf]
        %v478 = vld [vmem:[#allocation10 + $0x14] sm:$0xf]
        %v479 = vld [vmem:[#allocation10 + $0x18] sm:$0xf]
        %v480 = vld [vmem:[#allocation10 + $0x1c] sm:$0xf]
        %v481 = vld [vmem:[#allocation10 + $0x20] sm:$0xf]
        %v482 = vld [vmem:[#allocation10 + $0x24] sm:$0xf]
        %v483 = vld [vmem:[#allocation10 + $0x28] sm:$0xf]
        %v484 = vld [vmem:[#allocation10 + $0x2c] sm:$0xf]
        %v485 = vld [vmem:[#allocation10 + $0x30] sm:$0xf]
        %v486 = vld [vmem:[#allocation10 + $0x34] sm:$0xf]
        %v487 = vld [vmem:[#allocation10 + $0x38] sm:$0xf]
        %v488 = vld [vmem:[#allocation10 + $0x3c] sm:$0xf]
        %v489 = vld [vmem:[%s5] sm:$0x1]
        %v506 = vunpack.c.l.b16 %v473
        %v507 = vunpack.c.l.b16 %v474
        %v508 = vunpack.c.l.b16 %v475
        %v509 = vunpack.c.l.b16 %v476
        %v510 = vunpack.c.l.b16 %v477
        %v511 = vunpack.c.l.b16 %v478
        %v512 = vunpack.c.l.b16 %v479
        %v513 = vunpack.c.l.b16 %v480
        %v514 = vunpack.c.l.b16 %v481
        %v515 = vunpack.c.l.b16 %v482
        %v516 = vunpack.c.l.b16 %v483
        %v517 = vunpack.c.l.b16 %v484
        %v518 = vunpack.c.l.b16 %v485
        %v519 = vunpack.c.l.b16 %v486
        %v520 = vunpack.c.l.b16 %v487
        %v521 = vunpack.c.l.b16 %v488
        %v522 = vpack.c.b16 %v507, %v506
        %v523 = vpack.c.b16 %v509, %v508
        %v524 = vpack.c.b16 %v511, %v510
        %v525 = vpack.c.b16 %v513, %v512
        %v526 = vpack.c.b16 %v515, %v514
        %v527 = vpack.c.b16 %v517, %v516
        %v528 = vpack.c.b16 %v519, %v518
        %v529 = vpack.c.b16 %v521, %v520
        %538 = vmatprep.subr.bf16.mxu0 0
        %539 = vmatpush1.bf16.msra.mxu0 %v522
        %540 = vmatprep.subr.bf16.mxu0 0
        %541 = vmatpush1.bf16.msra.mxu0 %v523
        %542 = vmatprep.subr.bf16.mxu0 0
        %543 = vmatpush1.bf16.msra.mxu0 %v524
        %544 = vmatprep.subr.bf16.mxu0 0
        %545 = vmatpush1.bf16.msra.mxu0 %v525
        %546 = vmatprep.subr.bf16.mxu0 0
        %547 = vmatpush1.bf16.msra.mxu0 %v526
        %548 = vmatprep.subr.bf16.mxu0 0
        %549 = vmatpush1.bf16.msra.mxu0 %v527
        %550 = vmatprep.subr.bf16.mxu0 0
        %551 = vmatpush1.bf16.msra.mxu0 %v528
        %552 = vmatprep.subr.bf16.mxu0 0
        %553 = vmatpush1.bf16.msra.mxu0 %v529
        %554 = vmatprep.subr.bf16.mxu0 0
        %555 = vmatpush1.bf16.msra.mxu0 0
        %556 = vmatprep.subr.bf16.mxu0 0
        %557 = vmatpush1.bf16.msra.mxu0 0
        %558 = vmatprep.subr.bf16.mxu0 0
        %559 = vmatpush1.bf16.msra.mxu0 0
        %560 = vmatprep.subr.bf16.mxu0 0
        %561 = vmatpush1.bf16.msra.mxu0 0
        %562 = vmatprep.subr.bf16.mxu0 0
        %563 = vmatpush1.bf16.msra.mxu0 0
        %564 = vmatprep.subr.bf16.mxu0 0
        %565 = vmatpush1.bf16.msra.mxu0 0
        %566 = vmatprep.subr.bf16.mxu0 0
        %567 = vmatpush1.bf16.msra.mxu0 0
        %568 = vmatprep.subr.bf16.mxu0 0
        %569 = vmatpush1.bf16.msra.mxu0 0
        %570 = vmatprep.mubr.bf16.mxu0 0
        %571 = vmatmul.mubr.bf16.gmra.mrb[0].mxu0 %v472
        %v572 = vpop.f32.mrb[0].mxu0
        %v573 = vadd.f32 %v489, %v572
        %v574 = vpop.f32.mrb[0].mxu0
        %v575 = vpop.f32.mrb[0].mxu0
        %v576 = vpop.f32.mrb[0].mxu0
        %577 = vdwg.mxu0
        %vm578 = vcmask 1040384
        %v579 = vsel %vm578, %v573, -inf
        %580 = vmax.xlane.f32.xlu0 %v579
        %v581 = vpop.xlane.xlu0 %580
        %v582 = vsub.f32 %v573, %v581
        %v583 = vmul.f32 %v582, 1.442695
        %v584 = vpow.pop %v583
        %v585 = vsel %vm578, %v584, 0.0
        %586 = vadd.xlane.f32.xlu0 %v585
        %v587 = vpop.xlane.xlu0 %586
        %v588 = vlog2.pop %v587
        %v589 = vmul.f32 %v588, 0.6931472
        %v590 = vadd.f32 %v589, %v581
        %v591 = vlaneseq
        %v592 = vand.u32 %v591, 127
        %s593 = sld [smem:[#allocation4 + %s29]]
        %v594 = vstv %s593
        %vm595 = vcmp.eq.s32.totalorder %v592, %v594
        %v596 = vsel %vm595, %v573, 0.0
        %v597 = vsel %vm578, %v596, 0.0
        %598 = vadd.xlane.f32.xlu0 %v597
        %v599 = vpop.xlane.xlu0 %598
        %v600 = vsub.f32 %v590, %v599
        %v601 = vadd.f32 %v600, 0.0
        %s602 = vtos %v601
        %s603 = scalar_lea.smem [#allocation11], %s29
        %604 = sst [smem:[%s603]] %s602
        %v605 = vld [vmem:[#allocation2] sm:$0x1]
        %v606 = vadd.f32 %v605, %v600
        %vm607 = vcmask 0
        %608 = vst.msk [vmem:[#allocation2] sm:$0x1] %vm607, %v606
        %p609 = scmp.eq.s32.totalorder %s29, 1
        // Predicated region
        $region57: #{tpu_custom_call.1} parent=39 // pred_check
          %p610 = pneg %p609
        $region58: #{tpu_custom_call.1} parent=39 // pred_check_branch
          %612 = sbr.rel (%p610) target = $region60
        $region59: #{tpu_custom_call.1} parent=39 // pred_region
          %v613 = vld [vmem:[#allocation2] sm:$0x1]
          %v614 = vadd.f32 %v613, 0.0
          %s615 = vtos %v614
          %s616 = smul.f32 %s615, 0.5
          %s617 = scalar_lea.smem [#allocation12], 0
          %618 = sst [smem:[%s617]] %s616
        $region60: #{tpu_custom_call.1} parent=39 // pred_fallthru
          _
        // Predicated region
        $region61: #{tpu_custom_call.1} parent=39 // pred_check
          %p619 = pneg %p152
        $region62: #{tpu_custom_call.1} parent=39 // pred_check_branch
          %621 = sbr.rel (%p619) target = $region64
        $region63: #{tpu_custom_call.1} parent=39 // pred_region
          %s623 = ssub.s32 16, 16
          %624 = vsyncadd [#allocation7], %s623
          %627 = dma.smem_to_hbm [#allocation11], 16, %s6, [#allocation7]
        $region64: #{tpu_custom_call.1} parent=39 // pred_fallthru
          _
        // Predicated region
        $region65: #{tpu_custom_call.1} parent=39 // pred_check
          %p628 = pneg %p173
        $region66: #{tpu_custom_call.1} parent=39 // pred_check_branch
          %630 = sbr.rel (%p628) target = $region68
        $region67: #{tpu_custom_call.1} parent=39 // pred_region
          %s632 = ssub.s32 16, 16
          %633 = vsyncadd [#allocation13], %s632
          %636 = dma.smem_to_hbm [#allocation12], 16, %s7, [#allocation13]
        $region68: #{tpu_custom_call.1} parent=39 // pred_fallthru
          _
        // Predicated region
        $region69: #{tpu_custom_call.1} parent=39 // pred_check
          %p637 = pneg %p152
        $region70: #{tpu_custom_call.1} parent=39 // pred_check_branch
          %639 = sbr.rel (%p637) target = $region72
        $region71: #{tpu_custom_call.1} parent=39 // pred_region
          %640 = dma.done [#allocation7], 16
        $region72: #{tpu_custom_call.1} parent=39 // pred_fallthru
          _
        // Predicated region
        $region73: #{tpu_custom_call.1} parent=39 // pred_check
          %p641 = pneg %p173
        $region74: #{tpu_custom_call.1} parent=39 // pred_check_branch
          %643 = sbr.rel (%p641) target = $region76
        $region75: #{tpu_custom_call.1} parent=39 // pred_region
          %644 = dma.done [#allocation13], 16
        $region76: #{tpu_custom_call.1} parent=39 // pred_fallthru
          _
        %645 = sfence
      $region40: #{tpu_custom_call.1} parent=5 // pred_fallthru
        _
      %p646 = scmp.le.s32.totalorder 2, %s24
      // Predicated region
      $region77: #{tpu_custom_call.1} parent=5 // pred_check
        %p647 = pneg %p646
      $region78: #{tpu_custom_call.1} parent=5 // pred_check_branch
        %649 = sbr.rel (%p647) target = $region80
      $region79: #{tpu_custom_call.1} parent=5 // pred_region
        %s650 = ssub.s32 %s24, 2
      $region80: #{tpu_custom_call.1} parent=5 // pred_fallthru
        _
    $region6: #{tpu_custom_call.1} parent=1 // loop_footer
      %s28 = sadd.s32 1, %s24
    $region7: #{tpu_custom_call.1} parent=1 // loop_footer_branch
      %23 = sbr.rel target = $region3
    $region8: #{tpu_custom_call.1} parent=1 // loop_exit
      _
    %651 = vsyncpa [#allocation6], 1
    %s652 = scalar_lea.sflag [#allocation6], 1
    %653 = vsyncpa %s652, 1
    %654 = vsyncpa [#allocation9], 1
    %655 = vsyncpa [#allocation7], 1
    %s656 = scalar_lea.sflag [#allocation7], 1
    %657 = vsyncpa %s656, 1
    %658 = vsyncpa [#allocation13], 1

</llo_original>
